<compile_context>
chip_gen: v7x
topology: tpu7x:2x2x1
jax: 0.10.0
libtpu: 0.0.40
codegen_flags: <defaults>
</compile_context>

<pallas_src>
import jax
import jax.numpy as jnp
import numpy as np
from jax.experimental import pallas as pl
from jax.experimental.pallas import tpu as pltpu


def weighted_pool_kernel(x_ref, mask_ref, w_ref, o_ref):
    # x_ref:    (TB, L, Dp)  block of batch rows (Dp lane-padded feature dim)
    # mask_ref: (TB, 1, L)
    # w_ref:    (1, Dp)      lane-dense weight row (f32), shared across blocks
    # o_ref:    (TB, 1, Dp)
    xf = x_ref[...].astype(jnp.float32)                 # (TB, L, Dp)
    m = mask_ref[...][:, 0, :]                          # (TB, L)
    w = w_ref[...]                                      # (1, Dp), f32

    # alpha = x @ weight as a VPU broadcast-multiply + lane (XLU) reduction.
    # Kept lane-major as (TB, L): no (L, 1) column, no transpose, no MXU.
    alpha = jnp.sum(xf * w, axis=-1)                    # (TB, L), f32

    # mask_logits: one vselect instead of sub+mul+add (binary mask).
    alpha = jnp.where(m != 0, alpha, jnp.float32(-1e30))

    # Softmax over the sequence axis (lane axis of (TB, L)), exact divide.
    amax = jnp.max(alpha, axis=-1, keepdims=True)       # (TB, 1)
    e = jnp.exp(alpha - amax)                           # (TB, L)
    denom = jnp.sum(e, axis=-1, keepdims=True)          # (TB, 1)
    alphas = e / denom                                  # (TB, L), f32

    # pooled[b, d] = sum_l alphas[b, l] * x[b, l, d]  (VPU multiply + sublane
    # reduction over L; the degenerate matvec would waste the MXU).
    pooled = jnp.sum(alphas[:, :, None] * xf, axis=1)   # (TB, Dp), f32
    o_ref[...] = pooled[:, None, :].astype(o_ref.dtype)


def _vmem_capacity_bytes():
    try:
        return int(pltpu.get_tpu_info().vmem_capacity_bytes)
    except Exception:
        return 64 * 1024 * 1024  # conservative fallback (v7x per-core VMEM)


def _num_tensorcores():
    try:
        return max(1, int(getattr(jax.devices()[0], "num_cores", 1)))
    except Exception:
        return 1


def _pick_batch_tile(B, L, Dp, x_itemsize, mask_itemsize, out_itemsize,
                     *, vmem_capacity, num_cores):
    """Batch tile TB (a divisor of B) balancing VMEM budget, pipelining and
    megacore sharding."""
    # Live VMEM bytes per batch row inside one grid step:
    #   double-buffered x input + one f32 intermediate copy of the block,
    #   plus (small) mask / output double buffers and softmax temps.
    per_row_live = (L * Dp * (2 * x_itemsize + 4)
                    + L * (2 * mask_itemsize + 8)
                    + Dp * (2 * out_itemsize + 4))
    budget = max(per_row_live, vmem_capacity // 6)       # ~21 MiB live on 128 MiB parts, ~11 MiB on v7x
    max_tb_budget = max(1, budget // per_row_live)

    desired_steps = max(4, 2 * num_cores)                # keep the pipeline + both TCs busy
    tb = max(1, B // desired_steps)
    floor_rows = -(-(512 * 1024) // max(1, L * Dp * x_itemsize))  # keep raw x tiles >= ~512 KiB
    tb = max(tb, floor_rows)
    tb = min(tb, max_tb_budget)                          # VMEM budget is a hard cap
    if B >= 2:
        tb = min(tb, B // 2)                             # always >= 2 grid steps (v7x megacore)
    tb = max(1, min(tb, B))

    # Snap to a divisor of B: prefer an even number of grid steps (megacore
    # balance), then sublane-aligned row counts, then the largest tile.
    divisors = [t for t in range(1, tb + 1) if B % t == 0]

    def _score(t):
        steps = B // t
        return (steps % 2 == 0, t % 8 == 0, t)

    return max(divisors, key=_score)


def _vmem_limit_bytes(TB, L, Dp, x_itemsize, mask_itemsize, out_itemsize,
                      vmem_capacity):
    live = (2 * TB * L * Dp * x_itemsize                 # double-buffered x tiles
            + 2 * TB * L * Dp * 4                        # f32 intermediates (upcast / products)
            + 2 * TB * (L * mask_itemsize + Dp * out_itemsize)
            + 2 * Dp * 4                                 # weight row (double-buffered)
            + 4 * TB * L * 4)                            # alpha / softmax temps
    limit = max(2 * live, 16 * 1024 * 1024)              # 2x margin, 16 MiB floor
    return int(min(limit, int(vmem_capacity * 0.75)))


def weighted_pool(x, mask, weight, *, batch_tile=None, vmem_limit_bytes=None):
    """x: (B, L, D); mask: (B, L); weight: (D, 1) module parameter."""
    B, L, D = x.shape
    assert mask.shape == (B, L)
    assert weight.shape == (D, 1)

    # Lane-align the feature dim: pad D up to a multiple of 128.  Zero weight
    # columns add nothing to alpha; zero x features produce zero pooled
    # outputs, which are sliced away below.
    Dp = max(128, ((D + 127) // 128) * 128)
    pad = Dp - D
    w_row = weight.reshape(1, D).astype(jnp.float32)
    if pad:
        x = jnp.pad(x, ((0, 0), (0, 0), (0, pad)))
        w_row = jnp.pad(w_row, ((0, 0), (0, pad)))
    mask3 = mask.reshape(B, 1, L)

    x_isz = jnp.dtype(x.dtype).itemsize
    m_isz = jnp.dtype(mask.dtype).itemsize
    o_isz = x_isz
    vmem_cap = _vmem_capacity_bytes()

    if batch_tile is None:
        batch_tile = _pick_batch_tile(B, L, Dp, x_isz, m_isz, o_isz,
                                      vmem_capacity=vmem_cap,
                                      num_cores=_num_tensorcores())
    TB = int(batch_tile)
    assert B % TB == 0, "batch tile must divide the batch size"
    grid = (B // TB,)

    if vmem_limit_bytes is None:
        vmem_limit_bytes = _vmem_limit_bytes(TB, L, Dp, x_isz, m_isz, o_isz,
                                             vmem_cap)

    out = pl.pallas_call(
        weighted_pool_kernel,
        out_shape=jax.ShapeDtypeStruct((B, 1, Dp), x.dtype),
        grid_spec=pltpu.PrefetchScalarGridSpec(
            num_scalar_prefetch=0,
            grid=grid,
            in_specs=[
                pl.BlockSpec((TB, L, Dp), lambda b: (b, 0, 0)),  # x block
                pl.BlockSpec((TB, 1, L), lambda b: (b, 0, 0)),   # mask block
                pl.BlockSpec((1, Dp), lambda b: (0, 0)),         # weight (shared)
            ],
            out_specs=pl.BlockSpec((TB, 1, Dp), lambda b: (b, 0, 0)),
        ),
        compiler_params=pltpu.CompilerParams(
            dimension_semantics=("parallel",),   # batch blocks shard across TCs
            vmem_limit_bytes=int(vmem_limit_bytes),
        ),
    )(x, mask3, w_row)

    return out.reshape(B, Dp)[:, :D]


def weighted_pool_ref(x, mask, weight):
    # Pure-JAX reference matching the PyTorch module exactly.
    alpha = jnp.einsum("bld,do->blo", x.astype(jnp.float32),
                       weight.astype(jnp.float32))                  # (B, L, 1)
    alpha = alpha + (1.0 - mask.astype(jnp.float32)[..., None]) * (-1e30)
    alphas = jax.nn.softmax(alpha, axis=1)                          # softmax over L
    pooled = jnp.einsum("bld,blo->bdo", x.astype(jnp.float32), alphas)
    return pooled[..., 0].astype(x.dtype)                           # (B, D)


if __name__ == "__main__":
    key = jax.random.PRNGKey(0)
    B, L, D = 2, 8, 32

    kx, _, kw = jax.random.split(key, 3)
    x = jax.random.normal(kx, (B, L, D), dtype=jnp.float32)

    # Binary mask with a few positions masked out (last 3 of batch 1).
    mask = jnp.ones((B, L), dtype=jnp.float32)
    mask = mask.at[1, L - 3:].set(0.0)

    # Deterministic Xavier-uniform init for weight of shape (D, 1):
    # bound = sqrt(6 / (fan_in + fan_out)) = sqrt(6 / (D + 1))
    bound = float(np.sqrt(6.0 / (D + 1)))
    weight = jax.random.uniform(kw, (D, 1), dtype=jnp.float32,
                                minval=-bound, maxval=bound)

    out = weighted_pool(x, mask, weight)
    out = jax.block_until_ready(out)

    ref = weighted_pool_ref(x, mask, weight)
    np.testing.assert_allclose(np.asarray(out), np.asarray(ref),
                               rtol=1e-5, atol=1e-5)
    print("KERNEL_OK")
</pallas_src>

<mosaic_0001>
module attributes {stable_mosaic.version = 11 : i64} {
  func.func @weighted_pool_kernel(%arg0: i32, %arg1: memref<1x8x128xf32, #tpu.memory_space<vmem>>, %arg2: memref<1x1x8xf32, #tpu.memory_space<vmem>>, %arg3: memref<1x128xf32, #tpu.memory_space<vmem>>, %arg4: memref<1x1x128xf32, #tpu.memory_space<vmem>>) attributes {dimension_semantics = [#tpu.dimension_semantics<parallel>], iteration_bounds = array<i64: 2>, scalar_prefetch = 0 : i64, scratch_operands = 0 : i64, tpu.core_type = #tpu.core_type<tc>, window_params = [{transform_indices = @transform_0, window_bounds = array<i64: 1, 8, 128>}, {transform_indices = @transform_1, window_bounds = array<i64: 1, 1, 8>}, {pipeline_mode = #tpu.pipeline_mode<synchronous>, transform_indices = @transform_2, window_bounds = array<i64: 1, 128>}, {transform_indices = @transform_3, window_bounds = array<i64: 1, 1, 128>}]} {
    %c0 = arith.constant 0 : index
    %c0_0 = arith.constant 0 : index
    %c0_1 = arith.constant 0 : index
    %0 = vector.load %arg1[%c0, %c0_0, %c0_1] : memref<1x8x128xf32, #tpu.memory_space<vmem>>, vector<1x8x128xf32>
    %c0_2 = arith.constant 0 : index
    %c0_3 = arith.constant 0 : index
    %c0_4 = arith.constant 0 : index
    %1 = vector.load %arg2[%c0_2, %c0_3, %c0_4] : memref<1x1x8xf32, #tpu.memory_space<vmem>>, vector<1x1x8xf32>
    %2 = vector.shape_cast %1 : vector<1x1x8xf32> to vector<1x8xf32>
    %c0_5 = arith.constant 0 : index
    %c0_6 = arith.constant 0 : index
    %3 = vector.load %arg3[%c0_5, %c0_6] : memref<1x128xf32, #tpu.memory_space<vmem>>, vector<1x128xf32>
    %4 = vector.shape_cast %3 : vector<1x128xf32> to vector<1x1x128xf32>
    %5 = vector.broadcast %4 : vector<1x1x128xf32> to vector<1x8x128xf32>
    %6 = arith.mulf %0, %5 : vector<1x8x128xf32>
    %cst = arith.constant dense<0.000000e+00> : vector<1x8xf32>
    %7 = vector.multi_reduction <add>, %6, %cst [2] : vector<1x8x128xf32> to vector<1x8xf32>
    %cst_7 = arith.constant 0.000000e+00 : f32
    %8 = vector.broadcast %cst_7 : f32 to vector<1x8xf32>
    %9 = arith.cmpf one, %2, %8 : vector<1x8xf32>
    %cst_8 = arith.constant -1.000000e+30 : f32
    %10 = vector.broadcast %cst_8 : f32 to vector<1x8xf32>
    %11 = arith.select %9, %7, %10 : vector<1x8xi1>, vector<1x8xf32>
    %cst_9 = arith.constant dense<0xFF800000> : vector<1xf32>
    %12 = vector.multi_reduction <maximumf>, %11, %cst_9 [1] : vector<1x8xf32> to vector<1xf32>
    %13 = vector.shape_cast %12 : vector<1xf32> to vector<1x1xf32>
    %14 = vector.broadcast %13 : vector<1x1xf32> to vector<1x8xf32>
    %15 = arith.subf %11, %14 : vector<1x8xf32>
    %16 = math.exp %15 : vector<1x8xf32>
    %cst_10 = arith.constant dense<0.000000e+00> : vector<1xf32>
    %17 = vector.multi_reduction <add>, %16, %cst_10 [1] : vector<1x8xf32> to vector<1xf32>
    %18 = vector.shape_cast %17 : vector<1xf32> to vector<1x1xf32>
    %19 = vector.broadcast %18 : vector<1x1xf32> to vector<1x8xf32>
    %20 = arith.divf %16, %19 : vector<1x8xf32>
    %21 = vector.shape_cast %20 : vector<1x8xf32> to vector<1x8x1xf32>
    %22 = vector.broadcast %21 : vector<1x8x1xf32> to vector<1x8x128xf32>
    %23 = arith.mulf %22, %0 : vector<1x8x128xf32>
    %cst_11 = arith.constant dense<0.000000e+00> : vector<1x128xf32>
    %24 = vector.multi_reduction <add>, %23, %cst_11 [1] : vector<1x8x128xf32> to vector<1x128xf32>
    %25 = vector.shape_cast %24 : vector<1x128xf32> to vector<1x1x128xf32>
    %c0_12 = arith.constant 0 : index
    %c0_13 = arith.constant 0 : index
    %c0_14 = arith.constant 0 : index
    %26 = vector.load %arg4[%c0_12, %c0_13, %c0_14] : memref<1x1x128xf32, #tpu.memory_space<vmem>>, vector<1x1x128xf32>
    tpu.vector_store %arg4[%c0_12, %c0_13, %c0_14], %25 {strides = array<i32>} : memref<1x1x128xf32, #tpu.memory_space<vmem>>, vector<1x1x128xf32>,
    return
  }
  func.func @transform_0(%arg0: i32) -> (i32, i32, i32) {
    %c0_i32 = arith.constant 0 : i32
    %c0_i32_0 = arith.constant 0 : i32
    %c0_i32_1 = arith.constant 0 : i32
    return %arg0, %c0_i32, %c0_i32_0 : i32, i32, i32
  }
  func.func @transform_1(%arg0: i32) -> (i32, i32, i32) {
    %c0_i32 = arith.constant 0 : i32
    %c0_i32_0 = arith.constant 0 : i32
    %c0_i32_1 = arith.constant 0 : i32
    return %arg0, %c0_i32, %c0_i32_0 : i32, i32, i32
  }
  func.func @transform_2(%arg0: i32) -> (i32, i32) {
    %c0_i32 = arith.constant 0 : i32
    %c0_i32_0 = arith.constant 0 : i32
    %c0_i32_1 = arith.constant 0 : i32
    return %c0_i32, %c0_i32_0 : i32, i32
  }
  func.func @transform_3(%arg0: i32) -> (i32, i32, i32) {
    %c0_i32 = arith.constant 0 : i32
    %c0_i32_0 = arith.constant 0 : i32
    %c0_i32_1 = arith.constant 0 : i32
    return %arg0, %c0_i32, %c0_i32_0 : i32, i32, i32
  }
}

</mosaic_0001>

<llo_original>
// kernel: tpu_custom_call.1
$region0: #{tpu_custom_call.1}
  #allocation0 [shape = 'u32[]', space=smem, size = 0x4, offset = 0x4, fixed_abs, tag = 'smem constant byte address 0x4 - core index']
  #allocation1 [shape = 'u32[144,128]{1,0:T(1,128)}', space=vmem, size = 0x12000, scoped, tag = 'internal scratch']
  %s0 = inlined_call_operand.hbm [shape: f32[2,8,128], index: 0, kind: input, shape index: {}]
  %s1 = inlined_call_operand.vmem [shape: f32[2,1,8], index: 1, kind: input, shape index: {}]
  %s2 = inlined_call_operand.vmem [shape: f32[1,128], index: 2, kind: input, shape index: {}]
  %s3 = inlined_call_operand.hbm [shape: f32[2,1,128], index: 3, kind: output, shape index: {}]
  %s4 = sld [smem:[#allocation0]]
  $region49: #{tpu_custom_call.1} parent=0
    _
  %s6 = ssub.s32 1, %s4
  %s7 = scalar_select 0, %s6, %s4
  $region1: #{tpu_custom_call.1} parent=0
    #allocation2 [shape = 'u8[8192]{0}', space=vmem, size = 0x2000, scoped, tag = 'input window, operand 0']
    #allocation3 [shape = 's32[2]{0}', space=sflag, size = 0x8, scoped, tag = 'scoped memory for tpu_custom_call.1']
    #allocation4 [shape = 's32[2]{0}', space=sflag, size = 0x8, scoped, tag = 'scoped memory for tpu_custom_call.1']
    #allocation5 [shape = 'u8[1024]{0}', space=vmem, size = 0x400, scoped, tag = 'output window, operand 0']
    %8 = vsyncpa [#allocation3], 0
    %s9 = scalar_lea.sflag [#allocation3], 1
    %10 = vsyncpa %s9, 0
    %11 = vsyncpa [#allocation4], 0
    %s12 = scalar_lea.sflag [#allocation4], 1
    %13 = vsyncpa %s12, 0
    loop: start=0, step=1, limit=4
    $region2: #{tpu_custom_call.1} parent=1 // loop_pre_header
      _
    $region3: #{tpu_custom_call.1} parent=1 // loop_header
      %s15 = sphi 0, %s19
      %p16 = scmp.ge.s32.totalorder %s15, 4
      %s25 = sphi 0, %s27
      %s28 = sphi 0, %s25
      %s29 = sphi 0, %s28
      %s45 = sphi 0, %s29
      %s51 = sphi 0, %s53
      %s54 = sphi 0, %s51
      %s55 = sphi 0, %s54
      %s71 = sphi 0, %s55
      %s75 = sphi 0, %s75
      %s77 = sphi 0, %s75
      %s78 = sphi 0, %s77
      %s92 = sphi 0, %s78
      %s98 = sphi 0, %s100
      %s101 = sphi 0, %s98
      %s102 = sphi 0, %s101
      %s118 = sphi 0, %s102
    $region4: #{tpu_custom_call.1} parent=1 // loop_header_branch
      %18 = sbr.rel (%p16) target = $region8
    $region5: #{tpu_custom_call.1} parent=1 // loop_body
      %s20 = ssub.s32 %s15, 1
      %s21 = ssub.s32 %s15, 2
      %s22 = sadd.s32 %s15, 1
      %s23 = ssub.s32 %s15, %s22
      %p24 = scmp.eq.s32.totalorder %s23, 0
      %s26 = sadd.s32 %s25, 1
      %s27 = scalar_select %p24, %s25, %s26
      %p30 = pneg %p24
      %p31 = scmp.eq.s32.totalorder %s15, 1
      %p32 = por %p30, %p31
      %p33 = scmp.ne.s32.totalorder %s25, %s28
      %p34 = scmp.eq.s32.totalorder %s15, 0
      %p35 = por %p33, %p34
      %p36 = scmp.ne.s32.totalorder %s25, %s28
      %p37 = scmp.eq.s32.totalorder %s20, 1
      %p38 = por %p36, %p37
      %p39 = scmp.ne.s32.totalorder %s28, %s29
      %p40 = scmp.eq.s32.totalorder %s20, 0
      %p41 = por %p39, %p40
      %p42 = scmp.ne.s32.totalorder %s28, %s29
      %p43 = scmp.eq.s32.totalorder %s21, 1
      %p44 = por %p42, %p43
      %p46 = scmp.ne.s32.totalorder %s29, %s45
      %p47 = scmp.eq.s32.totalorder %s21, 0
      %p48 = por %p46, %p47
      %s49 = ssub.s32 %s15, %s22
      %p50 = scmp.eq.s32.totalorder %s49, 0
      %s52 = sadd.s32 %s51, 1
      %s53 = scalar_select %p50, %s51, %s52
      %p56 = pneg %p50
      %p57 = scmp.eq.s32.totalorder %s15, 1
      %p58 = por %p56, %p57
      %p59 = scmp.ne.s32.totalorder %s51, %s54
      %p60 = scmp.eq.s32.totalorder %s15, 0
      %p61 = por %p59, %p60
      %p62 = scmp.ne.s32.totalorder %s51, %s54
      %p63 = scmp.eq.s32.totalorder %s20, 1
      %p64 = por %p62, %p63
      %p65 = scmp.ne.s32.totalorder %s54, %s55
      %p66 = scmp.eq.s32.totalorder %s20, 0
      %p67 = por %p65, %p66
      %p68 = scmp.ne.s32.totalorder %s54, %s55
      %p69 = scmp.eq.s32.totalorder %s21, 1
      %p70 = por %p68, %p69
      %p72 = scmp.ne.s32.totalorder %s55, %s71
      %p73 = scmp.eq.s32.totalorder %s21, 0
      %p74 = por %p72, %p73
      %s76 = sadd.s32 %s75, 1
      %p79 = scmp.eq.s32.totalorder %s15, 1
      %p80 = scmp.ne.s32.totalorder %s75, %s77
      %p81 = scmp.eq.s32.totalorder %s15, 0
      %p82 = por %p80, %p81
      %p83 = scmp.ne.s32.totalorder %s75, %s77
      %p84 = scmp.eq.s32.totalorder %s20, 1
      %p85 = por %p83, %p84
      %p86 = scmp.ne.s32.totalorder %s77, %s78
      %p87 = scmp.eq.s32.totalorder %s20, 0
      %p88 = por %p86, %p87
      %p89 = scmp.ne.s32.totalorder %s77, %s78
      %p90 = scmp.eq.s32.totalorder %s21, 1
      %p91 = por %p89, %p90
      %p93 = scmp.ne.s32.totalorder %s78, %s92
      %p94 = scmp.eq.s32.totalorder %s21, 0
      %p95 = por %p93, %p94
      %s96 = ssub.s32 %s15, %s22
      %p97 = scmp.eq.s32.totalorder %s96, 0
      %s99 = sadd.s32 %s98, 1
      %s100 = scalar_select %p97, %s98, %s99
      %p103 = pneg %p97
      %p104 = scmp.eq.s32.totalorder %s15, 1
      %p105 = por %p103, %p104
      %p106 = scmp.ne.s32.totalorder %s98, %s101
      %p107 = scmp.eq.s32.totalorder %s15, 0
      %p108 = por %p106, %p107
      %p109 = scmp.ne.s32.totalorder %s98, %s101
      %p110 = scmp.eq.s32.totalorder %s20, 1
      %p111 = por %p109, %p110
      %p112 = scmp.ne.s32.totalorder %s101, %s102
      %p113 = scmp.eq.s32.totalorder %s20, 0
      %p114 = por %p112, %p113
      %p115 = scmp.ne.s32.totalorder %s101, %s102
      %p116 = scmp.eq.s32.totalorder %s21, 1
      %p117 = por %p115, %p116
      %p119 = scmp.ne.s32.totalorder %s102, %s118
      %p120 = scmp.eq.s32.totalorder %s21, 0
      %p121 = por %p119, %p120
      %p122 = scmp.le.s32.totalorder 1, %s15
      %p123 = scmp.lt.s32.totalorder %s15, 3
      %p124 = pnand %p122, %p123
      %p125 = pneg %p124
      // Predicated region
      $region9: #{tpu_custom_call.1} parent=5 // pred_check
        _
      $region10: #{tpu_custom_call.1} parent=5 // pred_check_branch
        %127 = sbr.rel (%p124) target = $region12
      $region11: #{tpu_custom_call.1} parent=5 // pred_region
        %s128 = ssub.s32 %s15, 1
        // Predicated region
        $region13: #{tpu_custom_call.1} parent=11 // pred_check
          %p129 = pneg %p88
        $region14: #{tpu_custom_call.1} parent=11 // pred_check_branch
          %131 = sbr.rel (%p129) target = $region16
        $region15: #{tpu_custom_call.1} parent=11 // pred_region
          _
        $region16: #{tpu_custom_call.1} parent=11 // pred_fallthru
          _
      $region12: #{tpu_custom_call.1} parent=5 // pred_fallthru
        _
      %p132 = scmp.lt.s32.totalorder %s15, 2
      // Predicated region
      $region17: #{tpu_custom_call.1} parent=5 // pred_check
        %p133 = pneg %p132
      $region18: #{tpu_custom_call.1} parent=5 // pred_check_branch
        %135 = sbr.rel (%p133) target = $region20
      $region19: #{tpu_custom_call.1} parent=5 // pred_region
        // Predicated region
        $region21: #{tpu_custom_call.1} parent=19 // pred_check
          %p136 = pneg %p35
        $region22: #{tpu_custom_call.1} parent=19 // pred_check_branch
          %138 = sbr.rel (%p136) target = $region24
        $region23: #{tpu_custom_call.1} parent=19 // pred_region
          %s139 = sand.u32 %s25, 1
          %s140 = scalar_lea.sflag [#allocation3], %s139
          %s141 = sand.u32 %s25, 1
          %s142 = smul.addr %s141, 8
          %s143 = scalar_lea.vmem [#allocation2], %s142
          %s145 = ssub.s32 128, 128
          %146 = vsyncadd %s140, %s145
          %s147 = smul.addr %s15, 128
          %s148 = scalar_lea.hbm %s0, %s147
          %s150 = sshll.u32 %s143, 4
          %s151 = int_to_ptr.vmem [resolvable:$true] %s150
          %153 = dma.hbm_to_vmem [thread:$0]  %s148, 128, %s151, %s140
        $region24: #{tpu_custom_call.1} parent=19 // pred_fallthru
          _
        // Predicated region
        $region25: #{tpu_custom_call.1} parent=19 // pred_check
          %p154 = pneg %p61
        $region26: #{tpu_custom_call.1} parent=19 // pred_check_branch
          %156 = sbr.rel (%p154) target = $region28
        $region27: #{tpu_custom_call.1} parent=19 // pred_region
          %p157 = scmp.lt.s32.totalorder %s15, 1
          %s158 = scalar_select %p157, %s15, 1
          %s159 = scalar_lea.vmem %s1, %s158
        $region28: #{tpu_custom_call.1} parent=19 // pred_fallthru
          _
      $region20: #{tpu_custom_call.1} parent=5 // pred_fallthru
        _
      %p160 = scmp.le.s32.totalorder 1, %s15
      %p161 = scmp.lt.s32.totalorder %s15, 3
      %p162 = pnand %p160, %p161
      %p163 = pneg %p162
      // Predicated region
      $region29: #{tpu_custom_call.1} parent=5 // pred_check
        _
      $region30: #{tpu_custom_call.1} parent=5 // pred_check_branch
        %165 = sbr.rel (%p162) target = $region32
      $region31: #{tpu_custom_call.1} parent=5 // pred_region
        %s166 = ssub.s32 %s15, 1
        %s167 = sand.u32 %s28, 1
        %s168 = scalar_lea.sflag [#allocation3], %s167
        %s169 = sand.u32 %s28, 1
        %s170 = smul.addr %s169, 8
        %s171 = scalar_lea.vmem [#allocation2], %s170
        // Predicated region
        $region33: #{tpu_custom_call.1} parent=31 // pred_check
          %p172 = pneg %p41
        $region34: #{tpu_custom_call.1} parent=31 // pred_check_branch
          %174 = sbr.rel (%p172) target = $region36
        $region35: #{tpu_custom_call.1} parent=31 // pred_region
          %175 = dma.done %s168, 128
        $region36: #{tpu_custom_call.1} parent=31 // pred_fallthru
          _
        %s176 = sand.u32 %s28, 1
        %s177 = scalar_lea.sflag [#allocation3], %s176
        %s178 = sand.u32 %s28, 1
        %s179 = smul.addr %s178, 8
        %s180 = scalar_lea.vmem [#allocation2], %s179
        %p181 = pneg %p41
        %p182 = pneg %p38
        %p183 = scmp.lt.s32.totalorder %s20, 1
        %s184 = scalar_select %p183, %s20, 1
        %s185 = scalar_lea.vmem %s1, %s184
        %p186 = pneg %p67
        %p187 = pneg %p64
        %p188 = pneg %p88
        %p189 = pneg %p85
        %p190 = pneg %p114
        %p191 = pneg %p111
        %s192 = sand.u32 %s101, 1
        %s193 = scalar_lea.sflag [#allocation4], %s192
        %s194 = sand.u32 %s101, 1
        %s195 = scalar_lea.vmem [#allocation5], %s194
        %p196 = scmp.lt.s32.totalorder %s20, 1
        %s197 = scalar_select %p196, %s20, 1
        %s198 = scalar_lea.vmem %s1, %s197
        %v199 = vld [vmem:[%s171] sm:$0xff]
        %v200 = vld [vmem:[%s198] sm:$0x1]
        %v201 = vld [vmem:[%s2] sm:$0x1]
        %v203 = vlaneseq
        %v204 = vshrl.u32 %v203, 7
        %v205 = vsub.s32 0, %v204
        %v206 = vrot.slane %v201, %v205
        %v208 = vmul.f32 %v199, %v206
        %209 = vadd.xlane.f32.xlu0 %v208
        %v210 = vpop.xlane.xlu0 %209
        %vm211 = vcmp.ne.f32.partialorder %v200, 0.0
        %v213 = vlaneseq
        %v214 = vshrl.u32 %v213, 7
        %v215 = vsub.s32 0, %v214
        %v216 = vrot.slane %v210, %v215
        %v217 = vlaneseq
        %v218 = vshrl.u32 %v217, 7
        %v219 = vsub.s32 1, %v218
        %v220 = vrot.slane %v210, %v219
        %v221 = vlaneseq
        %v222 = vshrl.u32 %v221, 7
        %v223 = vsub.s32 2, %v222
        %v224 = vrot.slane %v210, %v223
        %v225 = vlaneseq
        %v226 = vshrl.u32 %v225, 7
        %v227 = vsub.s32 3, %v226
        %v228 = vrot.slane %v210, %v227
        %v229 = vlaneseq
        %v230 = vshrl.u32 %v229, 7
        %v231 = vsub.s32 4, %v230
        %v232 = vrot.slane %v210, %v231
        %v233 = vlaneseq
        %v234 = vshrl.u32 %v233, 7
        %v235 = vsub.s32 5, %v234
        %v236 = vrot.slane %v210, %v235
        %v237 = vlaneseq
        %v238 = vshrl.u32 %v237, 7
        %v239 = vsub.s32 6, %v238
        %v240 = vrot.slane %v210, %v239
        %v241 = vlaneseq
        %v242 = vshrl.u32 %v241, 7
        %v243 = vsub.s32 7, %v242
        %v244 = vrot.slane %v210, %v243
        %v245 = vcombine.low %v216, %v220
        %v246 = vcombine.low %v224, %v228
        %v247 = vcombine.low %v232, %v236
        %v248 = vcombine.low %v240, %v244
        %v250 = vunpack.c.l.s4 1966171168
        %v251 = vunpack.c.0.s8 %v250
        %v252 = vlaneseq
        %v253 = vshrl.u32 %v252, 7
        %v254 = vsub.s32 %v251, %v253
        %v255 = vrot.slane %v245, %v254
        %v257 = vunpack.c.l.s4 1966171168
        %v258 = vunpack.c.0.s8 %v257
        %v259 = vlaneseq
        %v260 = vshrl.u32 %v259, 7
        %v261 = vsub.s32 %v258, %v260
        %v262 = vrot.slane %v246, %v261
        %v264 = vunpack.c.l.s4 1966171168
        %v265 = vunpack.c.0.s8 %v264
        %v266 = vlaneseq
        %v267 = vshrl.u32 %v266, 7
        %v268 = vsub.s32 %v265, %v267
        %v269 = vrot.slane %v247, %v268
        %v271 = vunpack.c.l.s4 1966171168
        %v272 = vunpack.c.0.s8 %v271
        %v273 = vlaneseq
        %v274 = vshrl.u32 %v273, 7
        %v275 = vsub.s32 %v272, %v274
        %v276 = vrot.slane %v248, %v275
        %v277 = vcombine.low %v255, %v262
        %v278 = vcombine.low %v269, %v276
        %v280 = vunpack.c.l.s4 1966171168
        %v281 = vunpack.c.0.s8 %v280
        %v282 = vlaneseq
        %v283 = vshrl.u32 %v282, 7
        %v284 = vsub.s32 %v281, %v283
        %v285 = vrot.slane %v277, %v284
        %v287 = vunpack.c.l.s4 1966171168
        %v288 = vunpack.c.0.s8 %v287
        %v289 = vlaneseq
        %v290 = vshrl.u32 %v289, 7
        %v291 = vsub.s32 %v288, %v290
        %v292 = vrot.slane %v278, %v291
        %v293 = vcombine.low %v285, %v292
        %294 = vset.pattern.permute.xlu0 0
        %295 = vperm.xlu0 %294, %v293
        %v296 = vpop.permute.xlu0 %295
        %v297 = vlaneseq
        %v298 = vand.u32 %v297, 127
        %v299 = vlaneseq
        %v300 = vshrl.u32 %v299, 7
        %v301 = vsub.s32 %v298, %v300
        %v302 = vrot.slane %v296, %v301
        %v304 = vunpack.c.l.s4 1966171168
        %v305 = vunpack.c.0.s8 %v304
        %v306 = vlaneseq
        %v307 = vshrl.u32 %v306, 7
        %v308 = vsub.s32 %v305, %v307
        %v309 = vrot.slane %v302, %v308
        %v311 = vunpack.c.l.s4 1966171168
        %v312 = vunpack.c.0.s8 %v311
        %v313 = vlaneseq
        %v314 = vshrl.u32 %v313, 7
        %v315 = vsub.s32 %v312, %v314
        %v316 = vrot.slane %v309, %v315
        %v318 = vsel %vm211, %v316, -1e+30
        %vm319 = vcmask 57344
        %v320 = vsel %vm319, %v318, -inf
        %321 = vmax.xlane.f32.xlu0 %v320
        %v322 = vpop.xlane.xlu0 %321
        %v323 = vsub.f32 %v318, %v322
        %v324 = vmul.f32 %v323, 1.442695
        %v325 = vpow.pop %v324
        %v326 = vsel %vm319, %v325, 0.0
        %327 = vadd.xlane.f32.xlu0 %v326
        %v328 = vpop.xlane.xlu0 %327
        %v329 = vrcp.pop %v328
        %v330 = vmul.f32 %v325, %v329
        %v331 = vlaneseq
        %v332 = vshrl.u32 %v331, 7
        %v333 = vsub.s32 0, %v332
        %v334 = vrot.slane %v330, %v333
        %336 = vbcast.lane.b32.xlu0 %v334, 256
        %v337 = vpop.permute.xlu0 %336
        %v338 = vmul.f32 %v337, %v199
        %v339 = vrot.slane %v338, 4
        %v340 = vadd.f32 %v338, %v339
        %v341 = vrot.slane %v340, 2
        %v342 = vadd.f32 %v340, %v341
        %v343 = vrot.slane %v342, 1
        %v344 = vadd.f32 %v342, %v343
        %345 = vst [vmem:[%s195] sm:$0x1] %v344
        %s346 = sand.u32 %s101, 1
        %s347 = scalar_lea.sflag [#allocation4], %s346
        %s348 = sand.u32 %s101, 1
        %s349 = scalar_lea.vmem [#allocation5], %s348
        // Predicated region
        $region37: #{tpu_custom_call.1} parent=31 // pred_check
          %p350 = pneg %p111
        $region38: #{tpu_custom_call.1} parent=31 // pred_check_branch
          %352 = sbr.rel (%p350) target = $region40
        $region39: #{tpu_custom_call.1} parent=31 // pred_region
          %s354 = ssub.s32 16, 16
          %355 = vsyncadd %s347, %s354
          %s356 = smul.addr %s20, 16
          %s357 = scalar_lea.hbm %s3, %s356
          %s359 = sshll.u32 %s349, 4
          %s360 = int_to_ptr.vmem [resolvable:$true] %s359
          %362 = dma.vmem_to_hbm [thread:$0]  %s360, 16, %s357, %s347
        $region40: #{tpu_custom_call.1} parent=31 // pred_fallthru
          _
      $region32: #{tpu_custom_call.1} parent=5 // pred_fallthru
        _
      %p363 = scmp.le.s32.totalorder 2, %s15
      // Predicated region
      $region41: #{tpu_custom_call.1} parent=5 // pred_check
        %p364 = pneg %p363
      $region42: #{tpu_custom_call.1} parent=5 // pred_check_branch
        %366 = sbr.rel (%p364) target = $region44
      $region43: #{tpu_custom_call.1} parent=5 // pred_region
        %s367 = ssub.s32 %s15, 2
        // Predicated region
        $region45: #{tpu_custom_call.1} parent=43 // pred_check
          %p368 = pneg %p117
        $region46: #{tpu_custom_call.1} parent=43 // pred_check_branch
          %370 = sbr.rel (%p368) target = $region48
        $region47: #{tpu_custom_call.1} parent=43 // pred_region
          %s371 = sand.u32 %s102, 1
          %s372 = scalar_lea.sflag [#allocation4], %s371
          %s373 = sand.u32 %s102, 1
          %s374 = scalar_lea.vmem [#allocation5], %s373
          %375 = dma.done %s372, 16
        $region48: #{tpu_custom_call.1} parent=43 // pred_fallthru
          _
      $region44: #{tpu_custom_call.1} parent=5 // pred_fallthru
        _
    $region6: #{tpu_custom_call.1} parent=1 // loop_footer
      %s19 = sadd.s32 1, %s15
    $region7: #{tpu_custom_call.1} parent=1 // loop_footer_branch
      %14 = sbr.rel target = $region3
    $region8: #{tpu_custom_call.1} parent=1 // loop_exit
      _
    %376 = vsyncpa [#allocation3], 1
    %s377 = scalar_lea.sflag [#allocation3], 1
    %378 = vsyncpa %s377, 1
    %379 = vsyncpa [#allocation4], 1
    %s380 = scalar_lea.sflag [#allocation4], 1
    %381 = vsyncpa %s380, 1

</llo_original>
